<compile_context>
chip_gen: v5e
topology: v5e:2x2
jax: 0.10.0
libtpu: 0.0.40
codegen_flags: <defaults>
</compile_context>

<pallas_src>
import functools

import jax
import jax.numpy as jnp
from jax.experimental import pallas as pl
from jax.experimental.pallas import tpu as pltpu


def _focal_kernel(x_ref, t_ref, o_ref, *, n_total, tile_n, mask_rows):
    # x_ref: (tile_n, C) logits (native dtype), t_ref: (tile_n, 1) int32,
    # o_ref: (1, 1, 1) f32 resident partial sum for the current parallel index.
    i = pl.program_id(1)

    @pl.when(i == 0)
    def _init():
        o_ref[...] = jnp.zeros_like(o_ref)

    x = x_ref[...].astype(jnp.float32)
    tn, c = x.shape

    # Numerically stable target log-softmax in the max-shifted domain:
    #   log_p = (x[t] - m) - log(sum(exp(x - m)))        (the m cancels)
    m = jnp.max(x, axis=1, keepdims=True)                                 # (tn,1)
    xm = x - m                                                            # (tn,C)
    lse = jnp.log(jnp.sum(jnp.exp(xm), axis=1, keepdims=True))            # (tn,1)
    class_ids = jax.lax.broadcasted_iota(jnp.int32, (tn, c), 1)
    x_t = jnp.sum(jnp.where(class_ids == t_ref[...], xm, 0.0),
                  axis=1, keepdims=True)                                  # (tn,1)
    log_p = x_t - lse
    p = jnp.exp(log_p)

    per_example = -((1.0 - p) ** 2) * log_p                               # (tn,1)

    if mask_rows:
        # Mask rows of partial / phantom tiles (cheap (tn,1) select; any
        # NaN/Inf produced from garbage rows is blocked here).
        base = (pl.program_id(0) * pl.num_programs(1) + i) * tile_n
        row_ids = base + jax.lax.broadcasted_iota(jnp.int32, (tn, 1), 0)
        per_example = jnp.where(row_ids < n_total, per_example, 0.0)

    o_ref[...] += jnp.sum(per_example)


def _vmem_limit_bytes():
    """Generation-aware scoped-VMEM limit (~5/8 of physical)."""
    phys = 128 * 1024 * 1024  # v5e / v6e default
    try:
        info = pltpu.get_tpu_info()
        cap = getattr(info, "vmem_capacity_bytes", None)
        if cap:
            phys = int(cap)           # 64 MiB on v7x -> ~40 MiB limit
    except Exception:
        pass
    return max(32 * 1024 * 1024, (phys * 5) // 8)


def _auto_tile_n(n, c, itemsize, vmem_limit):
    """Largest tile_n whose pipelined working set fits ~45% of the VMEM limit."""
    c_pad = max(128, ((c + 127) // 128) * 128)          # lane padding of logits
    per_row = (
        2 * c_pad * itemsize    # double-buffered native-dtype logits tile
        + 2 * c_pad * 4         # ~2 live f32 working tiles (xm / exp(xm))
        + 2 * 128 * 4           # double-buffered targets block, lane-padded to 128
    )
    budget = int(vmem_limit * 0.45)
    t = budget // per_row
    if t >= n:
        return n
    return max(8, (t // 8) * 8)


def focal_label_smooth(inputs, targets, *, tile_n=None):
    """inputs: (N, C) float logits (any float dtype); targets: (N,) int -> scalar loss."""
    n, c = inputs.shape
    t2d = targets.astype(jnp.int32).reshape(n, 1)

    vmem_limit = _vmem_limit_bytes()
    if tile_n is None:
        tile_n = _auto_tile_n(n, c, jnp.dtype(inputs.dtype).itemsize, vmem_limit)
    tile_n = min(tile_n, n)
    if tile_n < n:
        tile_n = max(8, (tile_n // 8) * 8)   # sublane rule unless full-N block

    total_tiles = pl.cdiv(n, tile_n)
    # Outer "parallel" axis: shards the reduction across v7x's 2 TensorCores;
    # no-op on single-TC chips.
    num_parallel = 2 if total_tiles >= 2 else 1
    inner = pl.cdiv(total_tiles, num_parallel)
    # Trace-time: do we have a partial last tile or phantom tiles to mask?
    mask_rows = (num_parallel * inner * tile_n) != n

    def block_idx(p, i):
        # Clamp phantom tiles of the parallel split onto the last real tile;
        # their rows are masked out inside the kernel.
        return jnp.minimum(p * inner + i, total_tiles - 1)

    kernel = functools.partial(_focal_kernel, n_total=n, tile_n=tile_n,
                               mask_rows=mask_rows)

    partials = pl.pallas_call(
        kernel,
        out_shape=jax.ShapeDtypeStruct((num_parallel, 1, 1), jnp.float32),
        grid_spec=pltpu.PrefetchScalarGridSpec(
            num_scalar_prefetch=0,
            grid=(num_parallel, inner),
            in_specs=[
                pl.BlockSpec((tile_n, c), lambda p, i: (block_idx(p, i), 0)),
                pl.BlockSpec((tile_n, 1), lambda p, i: (block_idx(p, i), 0)),
            ],
            out_specs=pl.BlockSpec((1, 1, 1), lambda p, i: (p, 0, 0)),
        ),
        compiler_params=pltpu.CompilerParams(
            dimension_semantics=("parallel", "arbitrary"),
            vmem_limit_bytes=int(vmem_limit),
        ),
    )(inputs, t2d)

    return jnp.sum(partials) / jnp.float32(n)


def _reference(inputs, targets):
    probs = jax.nn.softmax(inputs.astype(jnp.float32), axis=1)
    p = probs[jnp.arange(inputs.shape[0]), targets]
    return jnp.mean(-((1.0 - p) ** 2) * jnp.log(p))


if __name__ == "__main__":
    key = jax.random.PRNGKey(0)
    k1, k2 = jax.random.split(key)

    # Small but non-trivial: 20 rows, tile_n=8 -> total_tiles=3, grid (2,2):
    # exercises the parallel split, a partial last tile, and a fully-masked
    # phantom tile on the second parallel index.
    batch, num_classes = 20, 16
    logits = jax.random.normal(k1, (batch, num_classes), dtype=jnp.float32)
    targets = jax.random.randint(k2, (batch,), 0, num_classes, dtype=jnp.int32)

    loss_tiled = focal_label_smooth(logits, targets, tile_n=8)
    loss_auto = focal_label_smooth(logits, targets)      # single full-batch tile
    jax.block_until_ready((loss_tiled, loss_auto))

    ref = _reference(logits, targets)
    assert jnp.allclose(loss_tiled, ref, atol=1e-5, rtol=1e-5), (loss_tiled, ref)
    assert jnp.allclose(loss_auto, ref, atol=1e-5, rtol=1e-5), (loss_auto, ref)
    print("KERNEL_OK")
</pallas_src>

<mosaic_0001>
module attributes {stable_mosaic.version = 11 : i64} {
  func.func @_focal_kernel(%arg0: i32, %arg1: i32, %arg2: memref<8x16xf32, #tpu.memory_space<vmem>>, %arg3: memref<8x1xi32, #tpu.memory_space<vmem>>, %arg4: memref<1x1x1xf32, #tpu.memory_space<vmem>>) attributes {dimension_semantics = [#tpu.dimension_semantics<parallel>, #tpu.dimension_semantics<arbitrary>], iteration_bounds = array<i64: 2, 2>, scalar_prefetch = 0 : i64, scratch_operands = 0 : i64, tpu.core_type = #tpu.core_type<tc>, window_params = [{transform_indices = @transform_0, window_bounds = array<i64: 8, 16>}, {transform_indices = @transform_1, window_bounds = array<i64: 8, 1>}, {transform_indices = @transform_2, window_bounds = array<i64: 1, 1, 1>}]} {
    %c0_i32 = arith.constant 0 : i32
    %0 = arith.cmpi eq, %arg1, %c0_i32 : i32
    %1 = arith.extui %0 : i1 to i32
    %c0_i32_0 = arith.constant 0 : i32
    %2 = arith.cmpi ne, %1, %c0_i32_0 : i32
    scf.if %2 {
      %cst_17 = arith.constant 0.000000e+00 : f32
      %46 = vector.broadcast %cst_17 : f32 to vector<1x1x1xf32>
      %c0_18 = arith.constant 0 : index
      %c0_19 = arith.constant 0 : index
      %c0_20 = arith.constant 0 : index
      %47 = vector.load %arg4[%c0_18, %c0_19, %c0_20] : memref<1x1x1xf32, #tpu.memory_space<vmem>>, vector<1x1x1xf32>
      tpu.vector_store %arg4[%c0_18, %c0_19, %c0_20], %46 {strides = array<i32>} : memref<1x1x1xf32, #tpu.memory_space<vmem>>, vector<1x1x1xf32>,
    } else {
    }
    %c0 = arith.constant 0 : index
    %c0_1 = arith.constant 0 : index
    %3 = vector.load %arg2[%c0, %c0_1] : memref<8x16xf32, #tpu.memory_space<vmem>>, vector<8x16xf32>
    %cst = arith.constant dense<0xFF800000> : vector<8xf32>
    %4 = vector.multi_reduction <maximumf>, %3, %cst [1] : vector<8x16xf32> to vector<8xf32>
    %5 = vector.shape_cast %4 : vector<8xf32> to vector<8x1xf32>
    %6 = vector.broadcast %5 : vector<8x1xf32> to vector<8x16xf32>
    %7 = arith.subf %3, %6 : vector<8x16xf32>
    %8 = math.exp %7 : vector<8x16xf32>
    %cst_2 = arith.constant dense<0.000000e+00> : vector<8xf32>
    %9 = vector.multi_reduction <add>, %8, %cst_2 [1] : vector<8x16xf32> to vector<8xf32>
    %10 = vector.shape_cast %9 : vector<8xf32> to vector<8x1xf32>
    %11 = math.log %10 : vector<8x1xf32>
    %12 = tpu.iota {dimensions = array<i32: 1>} : vector<8x16xi32>
    %c0_3 = arith.constant 0 : index
    %c0_4 = arith.constant 0 : index
    %13 = vector.load %arg3[%c0_3, %c0_4] : memref<8x1xi32, #tpu.memory_space<vmem>>, vector<8x1xi32>
    %14 = vector.broadcast %13 : vector<8x1xi32> to vector<8x16xi32>
    %15 = arith.cmpi eq, %12, %14 : vector<8x16xi32>
    %cst_5 = arith.constant 0.000000e+00 : f32
    %16 = vector.broadcast %cst_5 : f32 to vector<8x16xf32>
    %17 = arith.select %15, %7, %16 : vector<8x16xi1>, vector<8x16xf32>
    %cst_6 = arith.constant dense<0.000000e+00> : vector<8xf32>
    %18 = vector.multi_reduction <add>, %17, %cst_6 [1] : vector<8x16xf32> to vector<8xf32>
    %19 = vector.shape_cast %18 : vector<8xf32> to vector<8x1xf32>
    %20 = arith.subf %19, %11 : vector<8x1xf32>
    %21 = math.exp %20 : vector<8x1xf32>
    %cst_7 = arith.constant 1.000000e+00 : f32
    %22 = vector.broadcast %cst_7 : f32 to vector<8x1xf32>
    %23 = arith.subf %22, %21 : vector<8x1xf32>
    %24 = arith.mulf %23, %23 : vector<8x1xf32>
    %cst_8 = arith.constant 0.000000e+00 : f32
    %25 = vector.broadcast %cst_8 : f32 to vector<8x1xf32>
    %26 = arith.subf %25, %24 : vector<8x1xf32>
    %27 = arith.mulf %26, %20 : vector<8x1xf32>
    %c2_i32 = arith.constant 2 : i32
    %28 = arith.muli %arg0, %c2_i32 : i32
    %29 = arith.addi %28, %arg1 : i32
    %c8_i32 = arith.constant 8 : i32
    %30 = arith.muli %29, %c8_i32 : i32
    %31 = tpu.iota {dimensions = array<i32: 0>} : vector<8x1xi32>
    %32 = vector.broadcast %30 : i32 to vector<8x1xi32>
    %33 = arith.addi %32, %31 : vector<8x1xi32>
    %c20_i32 = arith.constant 20 : i32
    %34 = vector.broadcast %c20_i32 : i32 to vector<8x1xi32>
    %35 = arith.cmpi slt, %33, %34 : vector<8x1xi32>
    %cst_9 = arith.constant 0.000000e+00 : f32
    %36 = vector.broadcast %cst_9 : f32 to vector<8x1xf32>
    %37 = arith.select %35, %27, %36 : vector<8x1xi1>, vector<8x1xf32>
    %c0_10 = arith.constant 0 : index
    %c0_11 = arith.constant 0 : index
    %c0_12 = arith.constant 0 : index
    %38 = vector.load %arg4[%c0_10, %c0_11, %c0_12] : memref<1x1x1xf32, #tpu.memory_space<vmem>>, vector<1x1x1xf32>
    %39 = vector.shape_cast %37 : vector<8x1xf32> to vector<1x8x1xf32>
    %cst_13 = arith.constant dense<0.000000e+00> : vector<1xf32>
    %40 = vector.multi_reduction <add>, %39, %cst_13 [1, 2] : vector<1x8x1xf32> to vector<1xf32>
    %41 = vector.shape_cast %40 : vector<1xf32> to vector<1x1x1xf32>
    %42 = vector.extract %41[0, 0, 0] : f32 from vector<1x1x1xf32>
    %43 = vector.broadcast %42 : f32 to vector<1x1x1xf32>
    %44 = arith.addf %38, %43 : vector<1x1x1xf32>
    %c0_14 = arith.constant 0 : index
    %c0_15 = arith.constant 0 : index
    %c0_16 = arith.constant 0 : index
    %45 = vector.load %arg4[%c0_14, %c0_15, %c0_16] : memref<1x1x1xf32, #tpu.memory_space<vmem>>, vector<1x1x1xf32>
    tpu.vector_store %arg4[%c0_14, %c0_15, %c0_16], %44 {strides = array<i32>} : memref<1x1x1xf32, #tpu.memory_space<vmem>>, vector<1x1x1xf32>,
    return
  }
  func.func @transform_0(%arg0: i32, %arg1: i32) -> (i32, i32) {
    %c2_i32 = arith.constant 2 : i32
    %0 = arith.muli %arg0, %c2_i32 : i32
    %1 = arith.addi %0, %arg1 : i32
    %c2_i32_0 = arith.constant 2 : i32
    %2 = arith.minsi %1, %c2_i32_0 : i32
    %c0_i32 = arith.constant 0 : i32
    %c0_i32_1 = arith.constant 0 : i32
    return %2, %c0_i32 : i32, i32
  }
  func.func @transform_1(%arg0: i32, %arg1: i32) -> (i32, i32) {
    %c2_i32 = arith.constant 2 : i32
    %0 = arith.muli %arg0, %c2_i32 : i32
    %1 = arith.addi %0, %arg1 : i32
    %c2_i32_0 = arith.constant 2 : i32
    %2 = arith.minsi %1, %c2_i32_0 : i32
    %c0_i32 = arith.constant 0 : i32
    %c0_i32_1 = arith.constant 0 : i32
    return %2, %c0_i32 : i32, i32
  }
  func.func @transform_2(%arg0: i32, %arg1: i32) -> (i32, i32, i32) {
    %c0_i32 = arith.constant 0 : i32
    %c0_i32_0 = arith.constant 0 : i32
    %c0_i32_1 = arith.constant 0 : i32
    return %arg0, %c0_i32, %c0_i32_0 : i32, i32, i32
  }
}

</mosaic_0001>

<llo_original>
// kernel: tpu_custom_call.1
$region0: #{tpu_custom_call.1}
  #allocation0 [shape = 'u32[]', space=smem, size = 0x4, offset = 0x4, fixed_abs, tag = 'smem constant byte address 0x4 - core index']
  #allocation1 [shape = 'u32[72,128]{1,0:T(1,128)}', space=vmem, size = 0x9000, scoped, tag = 'internal scratch']
  %s0 = inlined_call_operand.vmem [shape: f32[20,16], index: 0, kind: input, shape index: {}]
  %s1 = inlined_call_operand.vmem [shape: s32[20,1], index: 1, kind: input, shape index: {}]
  %s2 = inlined_call_operand.vmem [shape: f32[2,1,1], index: 2, kind: output, shape index: {}]
  %s3 = sld [smem:[#allocation0]]
  $region45: #{tpu_custom_call.1} parent=0
    _
  %s5 = ssub.s32 1, %s3
  %s6 = scalar_select 0, %s5, %s3
  loop: start=0, step=1, limit=6
  $region2: #{tpu_custom_call.1} parent=0 // loop_pre_header
    _
  $region3: #{tpu_custom_call.1} parent=0 // loop_header
    %s8 = sphi 0, %s12
    %p9 = scmp.ge.s32.totalorder %s8, 6
    %s15 = sphi 0, %s27
    %s16 = sphi 0, %s23
    %s17 = sphi 0, %s15
    %s18 = sphi 0, %s16
    %s19 = sphi 0, %s17
    %s20 = sphi 0, %s18
    %s38 = sphi 0, %s40
    %s41 = sphi 0, %s38
    %s42 = sphi 0, %s41
    %s58 = sphi 0, %s42
    %s72 = sphi 0, %s74
    %s75 = sphi 0, %s72
    %s76 = sphi 0, %s75
    %s92 = sphi 0, %s76
    %s98 = sphi 0, %s100
    %s101 = sphi 0, %s98
    %s102 = sphi 0, %s101
    %s118 = sphi 0, %s102
  $region4: #{tpu_custom_call.1} parent=0 // loop_header_branch
    %11 = sbr.rel (%p9) target = $region8
  $region5: #{tpu_custom_call.1} parent=0 // loop_body
    %s13 = ssub.s32 %s8, 1
    %s14 = ssub.s32 %s8, 2
    %s21 = sadd.s32 1, %s16
    %p22 = scmp.ge.s32.totalorder %s21, 2
    %s23 = scalar_select %p22, 0, %s21
    %s24 = sadd.s32 1, %s15
    %s25 = scalar_select %p22, %s24, %s15
    %p26 = scmp.ge.s32.totalorder %s25, 2
    %s27 = scalar_select %p26, 0, %s25
    %s28 = smul.u32 %s15, 2
    %s29 = sadd.s32 %s28, %s16
    %p30 = scmp.lt.s32.totalorder %s29, 2
    %s31 = scalar_select %p30, %s29, 2
    %s32 = smul.u32 %s27, 2
    %s33 = sadd.s32 %s32, %s23
    %p34 = scmp.lt.s32.totalorder %s33, 2
    %s35 = scalar_select %p34, %s33, 2
    %s36 = ssub.s32 %s31, %s35
    %p37 = scmp.eq.s32.totalorder %s36, 0
    %s39 = sadd.s32 %s38, 1
    %s40 = scalar_select %p37, %s38, %s39
    %p43 = pneg %p37
    %p44 = scmp.eq.s32.totalorder %s8, 3
    %p45 = por %p43, %p44
    %p46 = scmp.ne.s32.totalorder %s38, %s41
    %p47 = scmp.eq.s32.totalorder %s8, 0
    %p48 = por %p46, %p47
    %p49 = scmp.ne.s32.totalorder %s38, %s41
    %p50 = scmp.eq.s32.totalorder %s13, 3
    %p51 = por %p49, %p50
    %p52 = scmp.ne.s32.totalorder %s41, %s42
    %p53 = scmp.eq.s32.totalorder %s13, 0
    %p54 = por %p52, %p53
    %p55 = scmp.ne.s32.totalorder %s41, %s42
    %p56 = scmp.eq.s32.totalorder %s14, 3
    %p57 = por %p55, %p56
    %p59 = scmp.ne.s32.totalorder %s42, %s58
    %p60 = scmp.eq.s32.totalorder %s14, 0
    %p61 = por %p59, %p60
    %s62 = smul.u32 %s15, 2
    %s63 = sadd.s32 %s62, %s16
    %p64 = scmp.lt.s32.totalorder %s63, 2
    %s65 = scalar_select %p64, %s63, 2
    %s66 = smul.u32 %s27, 2
    %s67 = sadd.s32 %s66, %s23
    %p68 = scmp.lt.s32.totalorder %s67, 2
    %s69 = scalar_select %p68, %s67, 2
    %s70 = ssub.s32 %s65, %s69
    %p71 = scmp.eq.s32.totalorder %s70, 0
    %s73 = sadd.s32 %s72, 1
    %s74 = scalar_select %p71, %s72, %s73
    %p77 = pneg %p71
    %p78 = scmp.eq.s32.totalorder %s8, 3
    %p79 = por %p77, %p78
    %p80 = scmp.ne.s32.totalorder %s72, %s75
    %p81 = scmp.eq.s32.totalorder %s8, 0
    %p82 = por %p80, %p81
    %p83 = scmp.ne.s32.totalorder %s72, %s75
    %p84 = scmp.eq.s32.totalorder %s13, 3
    %p85 = por %p83, %p84
    %p86 = scmp.ne.s32.totalorder %s75, %s76
    %p87 = scmp.eq.s32.totalorder %s13, 0
    %p88 = por %p86, %p87
    %p89 = scmp.ne.s32.totalorder %s75, %s76
    %p90 = scmp.eq.s32.totalorder %s14, 3
    %p91 = por %p89, %p90
    %p93 = scmp.ne.s32.totalorder %s76, %s92
    %p94 = scmp.eq.s32.totalorder %s14, 0
    %p95 = por %p93, %p94
    %s96 = ssub.s32 %s15, %s27
    %p97 = scmp.eq.s32.totalorder %s96, 0
    %s99 = sadd.s32 %s98, 1
    %s100 = scalar_select %p97, %s98, %s99
    %p103 = pneg %p97
    %p104 = scmp.eq.s32.totalorder %s8, 3
    %p105 = por %p103, %p104
    %p106 = scmp.ne.s32.totalorder %s98, %s101
    %p107 = scmp.eq.s32.totalorder %s8, 0
    %p108 = por %p106, %p107
    %p109 = scmp.ne.s32.totalorder %s98, %s101
    %p110 = scmp.eq.s32.totalorder %s13, 3
    %p111 = por %p109, %p110
    %p112 = scmp.ne.s32.totalorder %s101, %s102
    %p113 = scmp.eq.s32.totalorder %s13, 0
    %p114 = por %p112, %p113
    %p115 = scmp.ne.s32.totalorder %s101, %s102
    %p116 = scmp.eq.s32.totalorder %s14, 3
    %p117 = por %p115, %p116
    %p119 = scmp.ne.s32.totalorder %s102, %s118
    %p120 = scmp.eq.s32.totalorder %s14, 0
    %p121 = por %p119, %p120
    %p122 = scmp.le.s32.totalorder 1, %s8
    %p123 = scmp.lt.s32.totalorder %s8, 5
    %p124 = pnand %p122, %p123
    %p125 = pneg %p124
    // Predicated region
    $region9: #{tpu_custom_call.1} parent=5 // pred_check
      _
    $region10: #{tpu_custom_call.1} parent=5 // pred_check_branch
      %127 = sbr.rel (%p124) target = $region12
    $region11: #{tpu_custom_call.1} parent=5 // pred_region
      %s128 = ssub.s32 %s8, 1
    $region12: #{tpu_custom_call.1} parent=5 // pred_fallthru
      _
    %p129 = scmp.lt.s32.totalorder %s8, 4
    // Predicated region
    $region13: #{tpu_custom_call.1} parent=5 // pred_check
      %p130 = pneg %p129
    $region14: #{tpu_custom_call.1} parent=5 // pred_check_branch
      %132 = sbr.rel (%p130) target = $region16
    $region15: #{tpu_custom_call.1} parent=5 // pred_region
      // Predicated region
      $region17: #{tpu_custom_call.1} parent=15 // pred_check
        %p133 = pneg %p48
      $region18: #{tpu_custom_call.1} parent=15 // pred_check_branch
        %135 = sbr.rel (%p133) target = $region20
      $region19: #{tpu_custom_call.1} parent=15 // pred_region
        %s136 = smul.u32 %s15, 2
        %s137 = sadd.s32 %s136, %s16
        %p138 = scmp.lt.s32.totalorder %s137, 2
        %s139 = scalar_select %p138, %s137, 2
        %p140 = scmp.lt.s32.totalorder %s139, 2
        %s141 = scalar_select %p140, %s139, 2
        %s142 = smul.addr %s141, 8
        %s143 = scalar_lea.vmem %s0, %s142
        %s144 = smul.u32 %s15, 2
        %s145 = sadd.s32 %s144, %s16
        %p146 = scmp.lt.s32.totalorder %s145, 2
        %s147 = scalar_select %p146, %s145, 2
      $region20: #{tpu_custom_call.1} parent=15 // pred_fallthru
        _
      // Predicated region
      $region21: #{tpu_custom_call.1} parent=15 // pred_check
        %p148 = pneg %p82
      $region22: #{tpu_custom_call.1} parent=15 // pred_check_branch
        %150 = sbr.rel (%p148) target = $region24
      $region23: #{tpu_custom_call.1} parent=15 // pred_region
        %s151 = smul.u32 %s15, 2
        %s152 = sadd.s32 %s151, %s16
        %p153 = scmp.lt.s32.totalorder %s152, 2
        %s154 = scalar_select %p153, %s152, 2
        %p155 = scmp.lt.s32.totalorder %s154, 2
        %s156 = scalar_select %p155, %s154, 2
        %s157 = smul.addr %s156, 8
        %s158 = scalar_lea.vmem %s1, %s157
        %s159 = smul.u32 %s15, 2
        %s160 = sadd.s32 %s159, %s16
        %p161 = scmp.lt.s32.totalorder %s160, 2
        %s162 = scalar_select %p161, %s160, 2
      $region24: #{tpu_custom_call.1} parent=15 // pred_fallthru
        _
    $region16: #{tpu_custom_call.1} parent=5 // pred_fallthru
      _
    %p163 = scmp.le.s32.totalorder 1, %s8
    %p164 = scmp.lt.s32.totalorder %s8, 5
    %p165 = pnand %p163, %p164
    %p166 = pneg %p165
    // Predicated region
    $region25: #{tpu_custom_call.1} parent=5 // pred_check
      _
    $region26: #{tpu_custom_call.1} parent=5 // pred_check_branch
      %168 = sbr.rel (%p165) target = $region28
    $region27: #{tpu_custom_call.1} parent=5 // pred_region
      %s169 = ssub.s32 %s8, 1
      %s170 = smul.u32 %s17, 2
      %s171 = sadd.s32 %s170, %s18
      %p172 = scmp.lt.s32.totalorder %s171, 2
      %s173 = scalar_select %p172, %s171, 2
      %p174 = scmp.lt.s32.totalorder %s173, 2
      %s175 = scalar_select %p174, %s173, 2
      %s176 = smul.addr %s175, 8
      %s177 = scalar_lea.vmem %s0, %s176
      %p178 = pneg %p54
      %p179 = pneg %p51
      %s180 = smul.u32 %s17, 2
      %s181 = sadd.s32 %s180, %s18
      %p182 = scmp.lt.s32.totalorder %s181, 2
      %s183 = scalar_select %p182, %s181, 2
      %p184 = scmp.lt.s32.totalorder %s183, 2
      %s185 = scalar_select %p184, %s183, 2
      %s186 = smul.addr %s185, 8
      %s187 = scalar_lea.vmem %s1, %s186
      %p188 = pneg %p88
      %p189 = pneg %p85
      %p190 = pneg %p114
      %p191 = pneg %p111
      %p192 = scmp.lt.s32.totalorder %s17, 1
      %s193 = scalar_select %p192, %s17, 1
      %s194 = scalar_lea.vmem %s2, %s193
      %s195 = smul.u32 %s17, 2
      %s196 = sadd.s32 %s195, %s18
      %p197 = scmp.lt.s32.totalorder %s196, 2
      %s198 = scalar_select %p197, %s196, 2
      %p199 = scmp.lt.s32.totalorder %s198, 2
      %s200 = scalar_select %p199, %s198, 2
      %s201 = smul.addr %s200, 8
      %s202 = scalar_lea.vmem %s0, %s201
      %s203 = smul.u32 %s17, 2
      %s204 = sadd.s32 %s203, %s18
      %p205 = scmp.lt.s32.totalorder %s204, 2
      %s206 = scalar_select %p205, %s204, 2
      %s207 = smul.u32 %s17, 2
      %s208 = sadd.s32 %s207, %s18
      %p209 = scmp.lt.s32.totalorder %s208, 2
      %s210 = scalar_select %p209, %s208, 2
      %p211 = scmp.lt.s32.totalorder %s210, 2
      %s212 = scalar_select %p211, %s210, 2
      %s213 = smul.addr %s212, 8
      %s214 = scalar_lea.vmem %s1, %s213
      %s215 = smul.u32 %s17, 2
      %s216 = sadd.s32 %s215, %s18
      %p217 = scmp.lt.s32.totalorder %s216, 2
      %s218 = scalar_select %p217, %s216, 2
      %p219 = scmp.lt.s32.totalorder %s17, 1
      %s220 = scalar_select %p219, %s17, 1
      %s221 = scalar_lea.vmem %s2, %s220
      %p222 = scmp.eq.s32.totalorder %s18, 0
      // Predicated region
      $region29: #{tpu_custom_call.1} parent=27 // pred_check
        %p223 = pneg %p222
      $region30: #{tpu_custom_call.1} parent=27 // pred_check_branch
        %225 = sbr.rel (%p223) target = $region32
      $region31: #{tpu_custom_call.1} parent=27 // pred_region
        %vm226 = vcmask 0
        %227 = vst.msk [vmem:[%s221] sm:$0x1] %vm226, 0.0
      $region32: #{tpu_custom_call.1} parent=27 // pred_fallthru
        _
      %v228 = vld [vmem:[%s202] sm:$0xff]
      %vm229 = vcmask 130048
      %v230 = vsel %vm229, %v228, -inf
      %231 = vmax.xlane.f32.xlu0 %v230
      %v232 = vpop.xlane.xlu0 %231
      %v233 = vsub.f32 %v228, %v232
      %v234 = vmul.f32 %v233, 1.442695
      %v235 = vpow.pop %v234
      %v236 = vsel %vm229, %v235, 0.0
      %237 = vadd.xlane.f32.xlu0 %v236
      %v238 = vpop.xlane.xlu0 %237
      %v239 = vlog2.pop %v238
      %v240 = vmul.f32 %v239, 0.6931472
      %v241 = vlaneseq
      %v242 = vand.u32 %v241, 127
      %v243 = vld [vmem:[%s214] sm:$0xff]
      %244 = vset.pattern.permute.xlu0 0
      %245 = vperm.xlu0 %244, %v243
      %v246 = vpop.permute.xlu0 %245
      %vm247 = vcmp.eq.s32.totalorder %v242, %v246
      %v248 = vsel %vm247, %v233, 0.0
      %v249 = vsel %vm229, %v248, 0.0
      %250 = vadd.xlane.f32.xlu0 %v249
      %v251 = vpop.xlane.xlu0 %250
      %v252 = vsub.f32 %v251, %v240
      %v253 = vmul.f32 %v252, 1.442695
      %v254 = vpow.pop %v253
      %v255 = vsub.f32 1.0, %v254
      %v256 = vmul.f32 %v255, %v255
      %v257 = vsub.f32 0.0, %v256
      %v258 = vmul.f32 %v257, %v252
      %s259 = smul.u32 %s17, 2
      %s260 = sadd.s32 %s259, %s18
      %s261 = smul.u32 %s260, 8
      %v262 = vlaneseq
      %v263 = vshrl.u32 %v262, 7
      %v264 = vstv %s261
      %v265 = vadd.s32 %v264, %v263
      %vm266 = vcmp.lt.s32.totalorder %v265, 20
      %v267 = vsel %vm266, %v258, 0.0
      %v268 = vld [vmem:[%s221] sm:$0x1]
      %vm269 = vcmask 7168
      %v270 = vsel %vm269, %v267, 0.0
      %271 = vadd.xlane.f32.xlu0 %v270
      %v272 = vpop.xlane.xlu0 %271
      %v273 = vrot.slane %v272, 4
      %v274 = vadd.f32 %v272, %v273
      %v275 = vrot.slane %v274, 2
      %v276 = vadd.f32 %v274, %v275
      %v277 = vrot.slane %v276, 1
      %v278 = vadd.f32 %v276, %v277
      %s279 = vtos %v278
      %v280 = vstv %s279
      %v281 = vadd.f32 %v268, %v280
      %vm282 = vcmask 0
      %283 = vst.msk [vmem:[%s221] sm:$0x1] %vm282, %v281
      %p284 = scmp.lt.s32.totalorder %s17, 1
      %s285 = scalar_select %p284, %s17, 1
      %s286 = scalar_lea.vmem %s2, %s285
      // Predicated region
      $region33: #{tpu_custom_call.1} parent=27 // pred_check
        %p287 = pneg %p111
      $region34: #{tpu_custom_call.1} parent=27 // pred_check_branch
        %289 = sbr.rel (%p287) target = $region36
      $region35: #{tpu_custom_call.1} parent=27 // pred_region
        _
      $region36: #{tpu_custom_call.1} parent=27 // pred_fallthru
        _
    $region28: #{tpu_custom_call.1} parent=5 // pred_fallthru
      _
    %p290 = scmp.le.s32.totalorder 2, %s8
    // Predicated region
    $region37: #{tpu_custom_call.1} parent=5 // pred_check
      %p291 = pneg %p290
    $region38: #{tpu_custom_call.1} parent=5 // pred_check_branch
      %293 = sbr.rel (%p291) target = $region40
    $region39: #{tpu_custom_call.1} parent=5 // pred_region
      %s294 = ssub.s32 %s8, 2
      // Predicated region
      $region41: #{tpu_custom_call.1} parent=39 // pred_check
        %p295 = pneg %p117
      $region42: #{tpu_custom_call.1} parent=39 // pred_check_branch
        %297 = sbr.rel (%p295) target = $region44
      $region43: #{tpu_custom_call.1} parent=39 // pred_region
        %p298 = scmp.lt.s32.totalorder %s19, 1
        %s299 = scalar_select %p298, %s19, 1
        %s300 = scalar_lea.vmem %s2, %s299
      $region44: #{tpu_custom_call.1} parent=39 // pred_fallthru
        _
    $region40: #{tpu_custom_call.1} parent=5 // pred_fallthru
      _
  $region6: #{tpu_custom_call.1} parent=0 // loop_footer
    %s12 = sadd.s32 1, %s8
  $region7: #{tpu_custom_call.1} parent=0 // loop_footer_branch
    %7 = sbr.rel target = $region3
  $region8: #{tpu_custom_call.1} parent=0 // loop_exit
    _

</llo_original>
